<compile_context>
chip_gen: v5e
topology: v5e:2x2
jax: 0.10.0
libtpu: 0.0.40
codegen_flags: <defaults>
</compile_context>

<pallas_src>
import jax
import jax.numpy as jnp
from jax.experimental import pallas as pl
from jax.experimental.pallas import tpu as pltpu

_LANE = 128          # TPU lane width: pad num_classes up to this (dense stores)
_DEFAULT_TB = 8192   # rows per grid step (f32 x + bf16 out double buffers ~12 MiB)

# Native sublane packing per streamed-x dtype (rows per vreg).
_SUBLANE_FOR = {
    jnp.dtype(jnp.float32): 8,
    jnp.dtype(jnp.bfloat16): 16,
    jnp.dtype(jnp.int8): 32,
    jnp.dtype(jnp.float8_e4m3fn): 32,
    jnp.dtype(jnp.float8_e5m2): 32,
}


def _round_up(x, m):
    return ((x + m - 1) // m) * m


def _linear_kernel(x_ref, w_ref, b_ref, o_ref):
    # x_ref: (TB, K), w_ref: (K, Np), b_ref: (1, Np), o_ref: (TB, Np)
    acc = jnp.dot(x_ref[...], w_ref[...], preferred_element_type=jnp.float32)
    # Bias add + epilogue in f32 (v5e VPU has no bf16); cast only on the store.
    o_ref[...] = (acc + b_ref[...]).astype(o_ref.dtype)


def linear_pallas(x, w_padded, b2d, *, tb=_DEFAULT_TB, out_dtype=jnp.bfloat16):
    """y = x @ w_padded + b2d, batch-tiled Pallas matmul.

    x:        (B, K), streamed in its own dtype (never cast here).
    w_padded: (K, Np) with Np a multiple of 128 (lane-dense output columns).
    b2d:      (1, Np) float32 (bias add stays f32).
    Returns (B, Np) in out_dtype; caller slices [:, :num_classes].
    """
    B, K = x.shape
    Kw, Np = w_padded.shape
    assert K == Kw
    assert Np % _LANE == 0

    # Only the tiny weight is cast if dtypes mismatch; x stays as produced.
    if w_padded.dtype != x.dtype:
        w_padded = w_padded.astype(x.dtype)

    sub = _SUBLANE_FOR.get(jnp.dtype(x.dtype), 8)
    if B <= tb:
        # Single block covering the full (possibly ragged) batch: no padding,
        # no masking, block dims equal to the full array dims are allowed.
        TB = B
    else:
        # Multi-tile: TB on native sublane packing; ragged last block (if any)
        # is handled by Pallas OOB masking on the output writeback.
        TB = _round_up(min(tb, B), sub)

    grid = (pl.cdiv(B, TB),)

    x_bytes = B * K * jnp.dtype(x.dtype).itemsize
    w_bytes = K * Np * jnp.dtype(w_padded.dtype).itemsize
    b_bytes = Np * 4
    o_bytes = B * Np * jnp.dtype(out_dtype).itemsize

    out = pl.pallas_call(
        _linear_kernel,
        out_shape=jax.ShapeDtypeStruct((B, Np), out_dtype),
        grid=grid,
        in_specs=[
            pl.BlockSpec((TB, K), lambda i: (i, 0)),   # streamed, double-buffered
            pl.BlockSpec((K, Np), lambda i: (0, 0)),   # resident across the grid
            pl.BlockSpec((1, Np), lambda i: (0, 0)),   # resident across the grid
        ],
        out_specs=pl.BlockSpec((TB, Np), lambda i: (i, 0)),
        compiler_params=pltpu.CompilerParams(
            # Independent batch axis -> megacore-shardable on v7x.
            dimension_semantics=("parallel",),
        ),
        cost_estimate=pl.CostEstimate(
            flops=2 * B * K * Np,
            transcendentals=0,
            bytes_accessed=x_bytes + w_bytes + b_bytes + o_bytes,
        ),
    )(x, w_padded, b2d)
    return out


class ClassificationModelPallas:
    """JAX/Pallas port of the PyTorch ClassificationModel (Linear + squeeze)."""

    def __init__(self, in_channels=128, num_classes=10, key=None,
                 weight_dtype=jnp.float32, out_dtype=jnp.bfloat16):
        self.in_channels = in_channels
        self.num_classes = num_classes
        self.out_dtype = out_dtype
        if key is None:
            key = jax.random.PRNGKey(0)
        kw, kb = jax.random.split(key)
        # nn.Linear init: U(-1/sqrt(fan_in), 1/sqrt(fan_in)). PyTorch stores
        # weight as (num_classes, in_channels); we keep the transposed
        # (in_channels, num_classes) layout for the kernel matmul.
        bound = 1.0 / (in_channels ** 0.5)
        self.weight = jax.random.uniform(
            kw, (in_channels, num_classes), jnp.float32, -bound, bound)
        self.bias = jax.random.uniform(
            kb, (num_classes,), jnp.float32, -bound, bound)
        # All parameter prep (pad to a lane multiple, cast, bias reshape) is
        # done ONCE here, not per call.
        n_pad = _round_up(num_classes, _LANE)
        self.weight_padded = jnp.pad(
            self.weight, ((0, 0), (0, n_pad - num_classes))).astype(weight_dtype)
        self.bias_padded_2d = jnp.pad(
            self.bias, (0, n_pad - num_classes)).reshape(1, n_pad).astype(jnp.float32)

    def __call__(self, x, *args, tb=_DEFAULT_TB):
        # x is streamed in its own dtype; pass bf16 x (and weight_dtype=bf16)
        # if the producer already emits bf16 — the wrapper never casts x.
        y = linear_pallas(x, self.weight_padded, self.bias_padded_2d,
                          tb=tb, out_dtype=self.out_dtype)
        y = y[:, : self.num_classes]
        # PyTorch .squeeze(): drop all size-1 dims.
        return jnp.squeeze(y)


if __name__ == "__main__":
    key = jax.random.PRNGKey(0)
    k_model, k_x, k_x2 = jax.random.split(key, 3)

    in_channels = 128
    num_classes = 10
    batch = 2

    x = jax.random.normal(k_x, (batch, in_channels), jnp.float32)

    # Default model: f32 x / f32 W stream, bf16 logit writeback.
    model = ClassificationModelPallas(in_channels, num_classes, key=k_model)
    y = jax.block_until_ready(model(x))
    y_ref = jnp.squeeze(x @ model.weight + model.bias)
    assert y.shape == (batch, num_classes), y.shape
    assert jnp.allclose(y.astype(jnp.float32), y_ref, atol=3e-2, rtol=3e-2)

    # f32-output variant for a tight numerical check.
    model_f32 = ClassificationModelPallas(
        in_channels, num_classes, key=k_model, out_dtype=jnp.float32)
    y_f32 = jax.block_until_ready(model_f32(x))
    assert jnp.allclose(y_f32, y_ref, atol=1e-4, rtol=1e-4)

    # Multi-tile + ragged-batch path (no jnp.pad of x): grid=3, last block masked.
    x2 = jax.random.normal(k_x2, (300, in_channels), jnp.float32)
    y2 = jax.block_until_ready(model_f32(x2, tb=128))
    y2_ref = x2 @ model.weight + model.bias
    assert y2.shape == (300, num_classes), y2.shape
    assert jnp.allclose(y2, y2_ref, atol=1e-4, rtol=1e-4)

    # bf16-streaming variant: x is ALREADY bf16 from the producer (no wrapper
    # cast), weights pre-cast to bf16 at init, f32 MXU accumulate, bf16 store.
    model_bf16 = ClassificationModelPallas(
        in_channels, num_classes, key=k_model, weight_dtype=jnp.bfloat16,
        out_dtype=jnp.bfloat16)
    x2_bf16 = x2.astype(jnp.bfloat16)   # producer-side dtype, not a kernel prelude
    y3 = jax.block_until_ready(model_bf16(x2_bf16, tb=128))
    assert y3.shape == (300, num_classes), y3.shape
    assert jnp.allclose(y3.astype(jnp.float32), y2_ref, atol=5e-2, rtol=5e-2)

    print("KERNEL_OK")
</pallas_src>

<mosaic_0001>
module attributes {stable_mosaic.version = 11 : i64} {
  func.func @_linear_kernel(%arg0: i32, %arg1: memref<2x128xf32, #tpu.memory_space<vmem>>, %arg2: memref<128x128xf32, #tpu.memory_space<vmem>>, %arg3: memref<1x128xf32, #tpu.memory_space<vmem>>, %arg4: memref<2x128xbf16, #tpu.memory_space<vmem>>) attributes {dimension_semantics = [#tpu.dimension_semantics<parallel>], iteration_bounds = array<i64: 1>, scalar_prefetch = 0 : i64, scratch_operands = 0 : i64, tpu.core_type = #tpu.core_type<tc>, window_params = [{transform_indices = @transform_0, window_bounds = array<i64: 2, 128>}, {pipeline_mode = #tpu.pipeline_mode<synchronous>, transform_indices = @transform_1, window_bounds = array<i64: 128, 128>}, {pipeline_mode = #tpu.pipeline_mode<synchronous>, transform_indices = @transform_2, window_bounds = array<i64: 1, 128>}, {transform_indices = @transform_3, window_bounds = array<i64: 2, 128>}]} {
    %c0 = arith.constant 0 : index
    %c0_0 = arith.constant 0 : index
    %0 = vector.load %arg1[%c0, %c0_0] : memref<2x128xf32, #tpu.memory_space<vmem>>, vector<2x128xf32>
    %c0_1 = arith.constant 0 : index
    %c0_2 = arith.constant 0 : index
    %1 = vector.load %arg2[%c0_1, %c0_2] : memref<128x128xf32, #tpu.memory_space<vmem>>, vector<128x128xf32>
    %cst = arith.constant dense<0.000000e+00> : vector<2x128xf32>
    %2 = tpu.matmul %0, %1, %cst {dimension_numbers = #tpu.dot_dimension_numbers<[1], [0], [0], [1], [0, 0, 1, 1], [], []>} : vector<2x128xf32>, vector<128x128xf32>, vector<2x128xf32> -> vector<2x128xf32>
    %c0_3 = arith.constant 0 : index
    %c0_4 = arith.constant 0 : index
    %3 = vector.load %arg3[%c0_3, %c0_4] : memref<1x128xf32, #tpu.memory_space<vmem>>, vector<1x128xf32>
    %4 = vector.broadcast %3 : vector<1x128xf32> to vector<2x128xf32>
    %5 = arith.addf %2, %4 : vector<2x128xf32>
    %6 = arith.truncf %5 : vector<2x128xf32> to vector<2x128xbf16>
    %c0_5 = arith.constant 0 : index
    %c0_6 = arith.constant 0 : index
    %7 = vector.load %arg4[%c0_5, %c0_6] : memref<2x128xbf16, #tpu.memory_space<vmem>>, vector<2x128xbf16>
    tpu.vector_store %arg4[%c0_5, %c0_6], %6 {strides = array<i32>} : memref<2x128xbf16, #tpu.memory_space<vmem>>, vector<2x128xbf16>,
    return
  }
  func.func @transform_0(%arg0: i32) -> (i32, i32) {
    %c0_i32 = arith.constant 0 : i32
    %c0_i32_0 = arith.constant 0 : i32
    return %arg0, %c0_i32 : i32, i32
  }
  func.func @transform_1(%arg0: i32) -> (i32, i32) {
    %c0_i32 = arith.constant 0 : i32
    %c0_i32_0 = arith.constant 0 : i32
    %c0_i32_1 = arith.constant 0 : i32
    return %c0_i32, %c0_i32_0 : i32, i32
  }
  func.func @transform_2(%arg0: i32) -> (i32, i32) {
    %c0_i32 = arith.constant 0 : i32
    %c0_i32_0 = arith.constant 0 : i32
    %c0_i32_1 = arith.constant 0 : i32
    return %c0_i32, %c0_i32_0 : i32, i32
  }
  func.func @transform_3(%arg0: i32) -> (i32, i32) {
    %c0_i32 = arith.constant 0 : i32
    %c0_i32_0 = arith.constant 0 : i32
    return %arg0, %c0_i32 : i32, i32
  }
}

</mosaic_0001>

<llo_original>
// kernel: tpu_custom_call.1
$region0: #{tpu_custom_call.1}
  #allocation0 [shape = 'u32[]', space=smem, size = 0x4, offset = 0x4, fixed_abs, tag = 'smem constant byte address 0x4 - core index']
  #allocation1 [shape = 'u32[72,128]{1,0:T(1,128)}', space=vmem, size = 0x9000, scoped, tag = 'internal scratch']
  %s0 = inlined_call_operand.hbm [shape: f32[2,128], index: 0, kind: input, shape index: {}]
  %s1 = inlined_call_operand.hbm [shape: f32[128,128], index: 1, kind: input, shape index: {}]
  %s2 = inlined_call_operand.vmem [shape: f32[1,128], index: 2, kind: input, shape index: {}]
  %s3 = inlined_call_operand.hbm [shape: bf16[2,128], index: 3, kind: output, shape index: {}]
  %s4 = sld [smem:[#allocation0]]
  $region30: #{tpu_custom_call.1} parent=0
    _
  %s6 = ssub.s32 1, %s4
  %s7 = scalar_select 0, %s6, %s4
  $region1: #{tpu_custom_call.1} parent=0
    #allocation2 [shape = 'u8[1024]{0}', space=vmem, size = 0x400, scoped, tag = 'input window, operand 0, single buffered']
    #allocation3 [shape = 's32[1]{0}', space=sflag, size = 0x4, scoped, tag = 'scoped memory for tpu_custom_call.1']
    #allocation4 [shape = 's32[1]{0}', space=sflag, size = 0x4, scoped, tag = 'scoped memory for tpu_custom_call.1']
    #allocation5 [shape = 'u8[65536]{0}', space=vmem, size = 0x10000, scoped, tag = 'input window, operand 1, single buffered']
    #allocation6 [shape = 's32[1]{0}', space=sflag, size = 0x4, scoped, tag = 'scoped memory for tpu_custom_call.1']
    #allocation7 [shape = 'u8[512]{0}', space=vmem, size = 0x400, scoped, tag = 'output window, operand 0, single buffered']
    %8 = vsyncpa [#allocation3], 0
    %9 = vsyncpa [#allocation6], 0
    %10 = vsyncpa [#allocation4], 0
    // Predicated region
    $region2: #{tpu_custom_call.1} parent=1 // pred_check
      _
    $region3: #{tpu_custom_call.1} parent=1 // pred_check_branch
      %12 = sbr.rel (0) target = $region5
    $region4: #{tpu_custom_call.1} parent=1 // pred_region
      %14 = vsyncadd [#allocation3], 0
      %s16 = sshll.u32 %s0, 4
      %s17 = int_to_ptr.hbm [resolvable:$true] %s16
      %s18 = sshll.u32 [#allocation2], 4
      %s19 = int_to_ptr.vmem [resolvable:$true] %s18
      %21 = dma.hbm_to_vmem [thread:$0]  %s17, 32, %s19, [#allocation3]
    $region5: #{tpu_custom_call.1} parent=1 // pred_fallthru
      _
    // Predicated region
    $region6: #{tpu_custom_call.1} parent=1 // pred_check
      _
    $region7: #{tpu_custom_call.1} parent=1 // pred_check_branch
      %23 = sbr.rel (0) target = $region9
    $region8: #{tpu_custom_call.1} parent=1 // pred_region
      %25 = vsyncadd [#allocation6], 0
      %s26 = sshll.u32 %s1, 4
      %s27 = int_to_ptr.hbm [resolvable:$true] %s26
      %s28 = sshll.u32 [#allocation5], 4
      %s29 = int_to_ptr.vmem [resolvable:$true] %s28
      %34 = dma.hbm_to_vmem [thread:$0]  %s27, 2048, %s29, [#allocation6], 128, 128, 8
    $region9: #{tpu_custom_call.1} parent=1 // pred_fallthru
      _
    // Predicated region
    $region10: #{tpu_custom_call.1} parent=1 // pred_check
      _
    $region11: #{tpu_custom_call.1} parent=1 // pred_check_branch
      %36 = sbr.rel (0) target = $region13
    $region12: #{tpu_custom_call.1} parent=1 // pred_region
      _
    $region13: #{tpu_custom_call.1} parent=1 // pred_fallthru
      _
    // Predicated region
    $region14: #{tpu_custom_call.1} parent=1 // pred_check
      _
    $region15: #{tpu_custom_call.1} parent=1 // pred_check_branch
      %38 = sbr.rel (0) target = $region17
    $region16: #{tpu_custom_call.1} parent=1 // pred_region
      %40 = dma.done [#allocation3], 32
    $region17: #{tpu_custom_call.1} parent=1 // pred_fallthru
      _
    // Predicated region
    $region18: #{tpu_custom_call.1} parent=1 // pred_check
      _
    $region19: #{tpu_custom_call.1} parent=1 // pred_check_branch
      %42 = sbr.rel (0) target = $region21
    $region20: #{tpu_custom_call.1} parent=1 // pred_region
      %44 = dma.done [#allocation6], 2048
    $region21: #{tpu_custom_call.1} parent=1 // pred_fallthru
      _
    %v45 = vld [vmem:[#allocation2] sm:$0x3]
    %v46 = vld [vmem:[#allocation5] sm:$0xff]
    %v47 = vld [vmem:[#allocation5 + $0x8] sm:$0xff]
    %v48 = vld [vmem:[#allocation5 + $0x10] sm:$0xff]
    %v49 = vld [vmem:[#allocation5 + $0x18] sm:$0xff]
    %v50 = vld [vmem:[#allocation5 + $0x20] sm:$0xff]
    %v51 = vld [vmem:[#allocation5 + $0x28] sm:$0xff]
    %v52 = vld [vmem:[#allocation5 + $0x30] sm:$0xff]
    %v53 = vld [vmem:[#allocation5 + $0x38] sm:$0xff]
    %v54 = vld [vmem:[#allocation5 + $0x40] sm:$0xff]
    %v55 = vld [vmem:[#allocation5 + $0x48] sm:$0xff]
    %v56 = vld [vmem:[#allocation5 + $0x50] sm:$0xff]
    %v57 = vld [vmem:[#allocation5 + $0x58] sm:$0xff]
    %v58 = vld [vmem:[#allocation5 + $0x60] sm:$0xff]
    %v59 = vld [vmem:[#allocation5 + $0x68] sm:$0xff]
    %v60 = vld [vmem:[#allocation5 + $0x70] sm:$0xff]
    %v61 = vld [vmem:[#allocation5 + $0x78] sm:$0xff]
    %v62 = vld [vmem:[%s2] sm:$0x1]
    %v64 = vperm.slane %v62, 0
    %66 = vmatpush.msra.mxu0 %v61
    %67 = vmatpush.msra.mxu0 %v60
    %68 = vmatpush.msra.mxu0 %v59
    %69 = vmatpush.msra.mxu0 %v58
    %70 = vmatpush.msra.mxu0 %v57
    %71 = vmatpush.msra.mxu0 %v56
    %72 = vmatpush.msra.mxu0 %v55
    %73 = vmatpush.msra.mxu0 %v54
    %74 = vmatpush.msra.mxu0 %v53
    %75 = vmatpush.msra.mxu0 %v52
    %76 = vmatpush.msra.mxu0 %v51
    %77 = vmatpush.msra.mxu0 %v50
    %78 = vmatpush.msra.mxu0 %v49
    %79 = vmatpush.msra.mxu0 %v48
    %80 = vmatpush.msra.mxu0 %v47
    %81 = vmatpush.msra.mxu0 %v46
    %82 = vmatmul.f32.gmra.mxu0 %v45
    %v83 = vpop.f32.mrf.mxu0
    %v84 = vadd.f32 %v64, %v83
    %85 = vdwg.mxu0
    %v86 = vpack.c.bf16 %v84, %v84
    %87 = vst [vmem:[#allocation7] sm:$0x1] %v86
    // Predicated region
    $region22: #{tpu_custom_call.1} parent=1 // pred_check
      _
    $region23: #{tpu_custom_call.1} parent=1 // pred_check_branch
      %89 = sbr.rel (0) target = $region25
    $region24: #{tpu_custom_call.1} parent=1 // pred_region
      %91 = vsyncadd [#allocation4], 0
      %s93 = sshll.u32 [#allocation7], 4
      %s94 = int_to_ptr.vmem [resolvable:$true] %s93
      %s95 = sshll.u32 %s3, 4
      %s96 = int_to_ptr.hbm [resolvable:$true] %s95
      %98 = dma.vmem_to_hbm [thread:$0]  %s94, 16, %s96, [#allocation4]
    $region25: #{tpu_custom_call.1} parent=1 // pred_fallthru
      _
    // Predicated region
    $region26: #{tpu_custom_call.1} parent=1 // pred_check
      _
    $region27: #{tpu_custom_call.1} parent=1 // pred_check_branch
      %100 = sbr.rel (0) target = $region29
    $region28: #{tpu_custom_call.1} parent=1 // pred_region
      %102 = dma.done [#allocation4], 16
    $region29: #{tpu_custom_call.1} parent=1 // pred_fallthru
      _
    %103 = vsyncpa [#allocation3], 1
    %104 = vsyncpa [#allocation6], 1
    %105 = vsyncpa [#allocation4], 1

</llo_original>
